<compile_context>
chip_gen: v6e
topology: v6e:2x2x1
jax: 0.10.0
libtpu: 0.0.40
codegen_flags: <defaults>
</compile_context>

<pallas_src>
import functools

import jax
import jax.numpy as jnp
from jax.experimental import pallas as pl
from jax.experimental.pallas import tpu as pltpu

MASKING_VALUE = -1e30
LANE = 128
RT_ALIGN = 16          # row-tile alignment (bf16 sublane packing: 16 rows / vreg)


def _round_up(x, m):
    return ((x + m - 1) // m) * m


# ---------------------------------------------------------------------------
# Pallas kernel: one row-tile of the flattened [N, d] input per grid step
# ---------------------------------------------------------------------------
def pred_kernel(x_ref, w_ref, b_ref, o_ref, *, n_classes, activation):
    # x_ref: [TR, d] bf16, w_ref: [d, Cp] bf16, b_ref: [1, Cp] f32, o_ref: [TR, C] f32
    # bf16 x bf16 -> f32 accumulate on the MXU; padded class columns (if any)
    # carry MASKING_VALUE via the bias padding for (log_)softmax, so no
    # in-kernel iota/compare/select is needed.
    logits = jnp.dot(x_ref[...], w_ref[...],
                     preferred_element_type=jnp.float32) + b_ref[...]

    if activation == "log_softmax":
        m = jnp.max(logits, axis=-1, keepdims=True)
        s = logits - m
        out = s - jnp.log(jnp.sum(jnp.exp(s), axis=-1, keepdims=True))
    elif activation == "softmax":
        m = jnp.max(logits, axis=-1, keepdims=True)
        p = jnp.exp(logits - m)
        # approx reciprocal on the EUP slot; rows sum to ~1 (inference-grade)
        out = p * pl.reciprocal(jnp.sum(p, axis=-1, keepdims=True), approx=True)
    elif activation == "relu":
        out = jnp.maximum(logits, 0.0)
    elif activation == "gelu":
        out = jax.nn.gelu(logits)
    elif activation == "tanh":
        out = jnp.tanh(logits)
    elif activation == "identity":
        out = logits
    else:
        raise ValueError(f"unsupported activation: {activation}")

    # Store only the real classes (unpadded lane slice -> fewer output HBM bytes).
    o_ref[...] = out[:, :n_classes]


# ---------------------------------------------------------------------------
# Wrapper
# ---------------------------------------------------------------------------
def pred_module(x, weight, bias, *, activation="log_softmax",
                row_tile=512, vmem_budget_bytes=20 << 20):
    """PredModule.forward: activation(x @ weight.T + bias).

    x: [B, M, d] float32; weight: [C, d] (PyTorch nn.Linear layout); bias: [C].
    Returns [B, M, C] float32.
    """
    B, M, d = x.shape
    C = weight.shape[0]

    # ---- layout plumbing (wrapper glue, not the hot path) ----------------
    N = B * M                                   # fold batch & time
    Cp = _round_up(C, LANE)                     # lane-dense class dim for the matmul

    # ---- row-tile selection -----------------------------------------------
    # Target big tiles (amortize ~0.35us/step), but keep >= 2 tiles so the
    # "parallel" grid axis spans both v7x TensorCores; 16-row aligned for bf16.
    half = _round_up(pl.cdiv(N, 2), RT_ALIGN)
    tr = max(RT_ALIGN, min(_round_up(row_tile, RT_ALIGN), half))
    # VMEM budget: resident weight/bias (x2 pipeline bufs) + double-buffered
    # bf16 x rows + f32 output rows.
    resident = 2 * (d * Cp * 2 + Cp * 4)
    per_row = 2 * (d * 2 + C * 4)
    max_tr = max(RT_ALIGN,
                 ((vmem_budget_bytes - resident) // max(per_row, 1))
                 // RT_ALIGN * RT_ALIGN)
    tr = min(tr, max_tr)
    Np = _round_up(N, tr)

    # x rows in bf16 (halves the dominant HBM read stream; cast is free here
    # since the padded copy is materialized anyway).
    x2 = jnp.pad(x.reshape(N, d), ((0, Np - N), (0, 0))).astype(jnp.bfloat16)
    # pre-transposed, lane-padded [d, Cp] weight in bf16 (resident in VMEM)
    w = jnp.pad(weight.T.astype(jnp.float32),
                ((0, 0), (0, Cp - C))).astype(jnp.bfloat16)
    # padded class columns get MASKING_VALUE via the bias (zero weight cols +
    # -1e30 bias) so (log_)softmax normalization ignores them; other
    # activations don't normalize across classes, so 0-padding is fine there
    # (padded columns are never stored anyway).
    pad_val = MASKING_VALUE if (activation in ("softmax", "log_softmax") and Cp > C) else 0.0
    b = jnp.pad(bias.astype(jnp.float32), (0, Cp - C),
                constant_values=pad_val).reshape(1, Cp)

    # Explicit VMEM limit: v5e default scoped VMEM is 16 MiB, v7x physical is
    # 64 MiB; stay comfortably inside both.
    needed = resident + 2 * tr * (d * 2 + C * 4) + (1 << 20)
    vmem_limit = int(min(max(2 * needed, 16 << 20), 48 << 20))

    kernel = functools.partial(pred_kernel, n_classes=C, activation=activation)

    # TODO(synk): for very large subword vocabularies (d*Cp*2 of several MiB),
    # add a class-dim grid axis with an online-softmax pass instead of holding
    # the whole [d, Cp] weight resident.
    out = pl.pallas_call(
        kernel,
        out_shape=jax.ShapeDtypeStruct((Np, C), jnp.float32),
        grid_spec=pltpu.PrefetchScalarGridSpec(
            num_scalar_prefetch=0,
            grid=(Np // tr,),
            in_specs=[
                pl.BlockSpec((tr, d), lambda i: (i, 0)),    # x rows (bf16)
                pl.BlockSpec((d, Cp), lambda i: (0, 0)),    # weight (replicated)
                pl.BlockSpec((1, Cp), lambda i: (0, 0)),    # bias (replicated)
            ],
            out_specs=pl.BlockSpec((tr, C), lambda i: (i, 0)),
        ),
        compiler_params=pltpu.CompilerParams(
            dimension_semantics=("parallel",),   # row tiles shard across v7x's 2 TCs
            vmem_limit_bytes=vmem_limit,
        ),
    )(x2, w, b)

    return out[:N].reshape(B, M, C)


# ---------------------------------------------------------------------------
# Pure-JAX reference (mirrors the PyTorch forward)
# ---------------------------------------------------------------------------
def reference_forward(x, weight, bias, *, activation="log_softmax"):
    y = jnp.einsum("bmd,cd->bmc", x, weight) + bias
    if activation == "log_softmax":
        return jax.nn.log_softmax(y, axis=-1)
    if activation == "softmax":
        return jax.nn.softmax(y, axis=-1)
    if activation == "relu":
        return jnp.maximum(y, 0.0)
    if activation == "gelu":
        return jax.nn.gelu(y)
    if activation == "tanh":
        return jnp.tanh(y)
    return y


# ---------------------------------------------------------------------------
# Main
# ---------------------------------------------------------------------------
if __name__ == "__main__":
    B, M, d_model, n_classes = 2, 16, 32, 29   # x: [B, M, d] -> out: [B, M, C]
    activation = "log_softmax"                 # typical speeq PredModule activation

    root = jax.random.PRNGKey(0)
    k_x, k_w, k_b = jax.random.split(root, 3)

    x = jax.random.normal(k_x, (B, M, d_model), dtype=jnp.float32)
    weight = jax.random.normal(k_w, (n_classes, d_model), dtype=jnp.float32) * 0.1
    bias = jax.random.normal(k_b, (n_classes,), dtype=jnp.float32) * 0.1

    # N = 32 rows -> two 16-row "parallel" tiles (both v7x TCs busy); on
    # v5e/v6e the batch/time rows are already folded into each tile's matmul.
    out = jax.block_until_ready(pred_module(x, weight, bias, activation=activation))
    ref = jax.block_until_ready(
        reference_forward(x, weight, bias, activation=activation))

    assert out.shape == (B, M, n_classes)
    # bf16 MXU operands -> relaxed tolerance vs the f32 reference
    max_err = float(jnp.max(jnp.abs(out - ref)))
    assert jnp.allclose(out, ref, atol=2e-2, rtol=2e-2), f"max abs err = {max_err}"

    print("KERNEL_OK")
</pallas_src>

<mosaic_0001>
module attributes {stable_mosaic.version = 11 : i64} {
  func.func @pred_kernel(%arg0: i32, %arg1: memref<16x32xbf16, #tpu.memory_space<vmem>>, %arg2: memref<32x128xbf16, #tpu.memory_space<vmem>>, %arg3: memref<1x128xf32, #tpu.memory_space<vmem>>, %arg4: memref<16x29xf32, #tpu.memory_space<vmem>>) attributes {dimension_semantics = [#tpu.dimension_semantics<parallel>], iteration_bounds = array<i64: 2>, scalar_prefetch = 0 : i64, scratch_operands = 0 : i64, tpu.core_type = #tpu.core_type<tc>, window_params = [{transform_indices = @transform_0, window_bounds = array<i64: 16, 32>}, {pipeline_mode = #tpu.pipeline_mode<synchronous>, transform_indices = @transform_1, window_bounds = array<i64: 32, 128>}, {pipeline_mode = #tpu.pipeline_mode<synchronous>, transform_indices = @transform_2, window_bounds = array<i64: 1, 128>}, {transform_indices = @transform_3, window_bounds = array<i64: 16, 29>}]} {
    %c0 = arith.constant 0 : index
    %c0_0 = arith.constant 0 : index
    %0 = vector.load %arg1[%c0, %c0_0] : memref<16x32xbf16, #tpu.memory_space<vmem>>, vector<16x32xbf16>
    %c0_1 = arith.constant 0 : index
    %c0_2 = arith.constant 0 : index
    %1 = vector.load %arg2[%c0_1, %c0_2] : memref<32x128xbf16, #tpu.memory_space<vmem>>, vector<32x128xbf16>
    %cst = arith.constant dense<0.000000e+00> : vector<16x128xf32>
    %2 = tpu.matmul %0, %1, %cst {dimension_numbers = #tpu.dot_dimension_numbers<[1], [0], [0], [1], [0, 0, 1, 1], [], []>} : vector<16x32xbf16>, vector<32x128xbf16>, vector<16x128xf32> -> vector<16x128xf32>
    %c0_3 = arith.constant 0 : index
    %c0_4 = arith.constant 0 : index
    %3 = vector.load %arg3[%c0_3, %c0_4] : memref<1x128xf32, #tpu.memory_space<vmem>>, vector<1x128xf32>
    %4 = vector.broadcast %3 : vector<1x128xf32> to vector<16x128xf32>
    %5 = arith.addf %2, %4 : vector<16x128xf32>
    %cst_5 = arith.constant dense<0xFF800000> : vector<16xf32>
    %6 = vector.multi_reduction <maximumf>, %5, %cst_5 [1] : vector<16x128xf32> to vector<16xf32>
    %7 = vector.shape_cast %6 : vector<16xf32> to vector<16x1xf32>
    %8 = vector.broadcast %7 : vector<16x1xf32> to vector<16x128xf32>
    %9 = arith.subf %5, %8 : vector<16x128xf32>
    %10 = math.exp %9 : vector<16x128xf32>
    %cst_6 = arith.constant dense<0.000000e+00> : vector<16xf32>
    %11 = vector.multi_reduction <add>, %10, %cst_6 [1] : vector<16x128xf32> to vector<16xf32>
    %12 = vector.shape_cast %11 : vector<16xf32> to vector<16x1xf32>
    %13 = math.log %12 : vector<16x1xf32>
    %14 = vector.broadcast %13 : vector<16x1xf32> to vector<16x128xf32>
    %15 = arith.subf %9, %14 : vector<16x128xf32>
    %16 = vector.extract_strided_slice %15 {offsets = [0, 0], sizes = [16, 29], strides = [1, 1]} : vector<16x128xf32> to vector<16x29xf32>
    %c0_7 = arith.constant 0 : index
    %c0_8 = arith.constant 0 : index
    %17 = vector.load %arg4[%c0_7, %c0_8] : memref<16x29xf32, #tpu.memory_space<vmem>>, vector<16x29xf32>
    tpu.vector_store %arg4[%c0_7, %c0_8], %16 {strides = array<i32>} : memref<16x29xf32, #tpu.memory_space<vmem>>, vector<16x29xf32>,
    return
  }
  func.func @transform_0(%arg0: i32) -> (i32, i32) {
    %c0_i32 = arith.constant 0 : i32
    %c0_i32_0 = arith.constant 0 : i32
    return %arg0, %c0_i32 : i32, i32
  }
  func.func @transform_1(%arg0: i32) -> (i32, i32) {
    %c0_i32 = arith.constant 0 : i32
    %c0_i32_0 = arith.constant 0 : i32
    %c0_i32_1 = arith.constant 0 : i32
    return %c0_i32, %c0_i32_0 : i32, i32
  }
  func.func @transform_2(%arg0: i32) -> (i32, i32) {
    %c0_i32 = arith.constant 0 : i32
    %c0_i32_0 = arith.constant 0 : i32
    %c0_i32_1 = arith.constant 0 : i32
    return %c0_i32, %c0_i32_0 : i32, i32
  }
  func.func @transform_3(%arg0: i32) -> (i32, i32) {
    %c0_i32 = arith.constant 0 : i32
    %c0_i32_0 = arith.constant 0 : i32
    return %arg0, %c0_i32 : i32, i32
  }
}

</mosaic_0001>

<llo_original>
// kernel: tpu_custom_call.1
$region0: #{tpu_custom_call.1}
  #allocation0 [shape = 'u32[]', space=smem, size = 0x4, offset = 0x4, fixed_abs, tag = 'smem constant byte address 0x4 - core index']
  #allocation1 [shape = 'u32[144,128]{1,0:T(1,128)}', space=vmem, size = 0x12000, scoped, tag = 'internal scratch']
  %s0 = inlined_call_operand.hbm [shape: bf16[32,32], index: 0, kind: input, shape index: {}]
  %s1 = inlined_call_operand.hbm [shape: bf16[32,128], index: 1, kind: input, shape index: {}]
  %s2 = inlined_call_operand.vmem [shape: f32[1,128], index: 2, kind: input, shape index: {}]
  %s3 = inlined_call_operand.hbm [shape: f32[32,29], index: 3, kind: output, shape index: {}]
  %s4 = sld [smem:[#allocation0]]
  $region53: #{tpu_custom_call.1} parent=0
    _
  %s6 = ssub.s32 1, %s4
  %s7 = scalar_select 0, %s6, %s4
  $region1: #{tpu_custom_call.1} parent=0
    #allocation2 [shape = 'u8[8192]{0}', space=vmem, size = 0x2000, scoped, tag = 'input window, operand 0']
    #allocation3 [shape = 's32[2]{0}', space=sflag, size = 0x8, scoped, tag = 'scoped memory for tpu_custom_call.1']
    #allocation4 [shape = 's32[2]{0}', space=sflag, size = 0x8, scoped, tag = 'scoped memory for tpu_custom_call.1']
    #allocation5 [shape = 'u8[8192]{0}', space=vmem, size = 0x2000, scoped, tag = 'input window, operand 1, single buffered']
    #allocation6 [shape = 's32[1]{0}', space=sflag, size = 0x4, scoped, tag = 'scoped memory for tpu_custom_call.1']
    #allocation7 [shape = 'u8[16384]{0}', space=vmem, size = 0x4000, scoped, tag = 'output window, operand 0']
    %8 = vsyncpa [#allocation3], 0
    %s9 = scalar_lea.sflag [#allocation3], 1
    %10 = vsyncpa %s9, 0
    %11 = vsyncpa [#allocation6], 0
    %12 = vsyncpa [#allocation4], 0
    %s13 = scalar_lea.sflag [#allocation4], 1
    %14 = vsyncpa %s13, 0
    loop: start=0, step=1, limit=4
    $region2: #{tpu_custom_call.1} parent=1 // loop_pre_header
      _
    $region3: #{tpu_custom_call.1} parent=1 // loop_header
      %s16 = sphi 0, %s20
      %p17 = scmp.ge.s32.totalorder %s16, 4
      %s26 = sphi 0, %s28
      %s29 = sphi 0, %s26
      %s30 = sphi 0, %s29
      %s46 = sphi 0, %s30
      %s50 = sphi 0, %s50
      %s52 = sphi 0, %s50
      %s53 = sphi 0, %s52
      %s67 = sphi 0, %s53
      %s71 = sphi 0, %s71
      %s73 = sphi 0, %s71
      %s74 = sphi 0, %s73
      %s88 = sphi 0, %s74
      %s94 = sphi 0, %s96
      %s97 = sphi 0, %s94
      %s98 = sphi 0, %s97
      %s114 = sphi 0, %s98
    $region4: #{tpu_custom_call.1} parent=1 // loop_header_branch
      %19 = sbr.rel (%p17) target = $region8
    $region5: #{tpu_custom_call.1} parent=1 // loop_body
      %s21 = ssub.s32 %s16, 1
      %s22 = ssub.s32 %s16, 2
      %s23 = sadd.s32 %s16, 1
      %s24 = ssub.s32 %s16, %s23
      %p25 = scmp.eq.s32.totalorder %s24, 0
      %s27 = sadd.s32 %s26, 1
      %s28 = scalar_select %p25, %s26, %s27
      %p31 = pneg %p25
      %p32 = scmp.eq.s32.totalorder %s16, 1
      %p33 = por %p31, %p32
      %p34 = scmp.ne.s32.totalorder %s26, %s29
      %p35 = scmp.eq.s32.totalorder %s16, 0
      %p36 = por %p34, %p35
      %p37 = scmp.ne.s32.totalorder %s26, %s29
      %p38 = scmp.eq.s32.totalorder %s21, 1
      %p39 = por %p37, %p38
      %p40 = scmp.ne.s32.totalorder %s29, %s30
      %p41 = scmp.eq.s32.totalorder %s21, 0
      %p42 = por %p40, %p41
      %p43 = scmp.ne.s32.totalorder %s29, %s30
      %p44 = scmp.eq.s32.totalorder %s22, 1
      %p45 = por %p43, %p44
      %p47 = scmp.ne.s32.totalorder %s30, %s46
      %p48 = scmp.eq.s32.totalorder %s22, 0
      %p49 = por %p47, %p48
      %s51 = sadd.s32 %s50, 1
      %p54 = scmp.eq.s32.totalorder %s16, 1
      %p55 = scmp.ne.s32.totalorder %s50, %s52
      %p56 = scmp.eq.s32.totalorder %s16, 0
      %p57 = por %p55, %p56
      %p58 = scmp.ne.s32.totalorder %s50, %s52
      %p59 = scmp.eq.s32.totalorder %s21, 1
      %p60 = por %p58, %p59
      %p61 = scmp.ne.s32.totalorder %s52, %s53
      %p62 = scmp.eq.s32.totalorder %s21, 0
      %p63 = por %p61, %p62
      %p64 = scmp.ne.s32.totalorder %s52, %s53
      %p65 = scmp.eq.s32.totalorder %s22, 1
      %p66 = por %p64, %p65
      %p68 = scmp.ne.s32.totalorder %s53, %s67
      %p69 = scmp.eq.s32.totalorder %s22, 0
      %p70 = por %p68, %p69
      %s72 = sadd.s32 %s71, 1
      %p75 = scmp.eq.s32.totalorder %s16, 1
      %p76 = scmp.ne.s32.totalorder %s71, %s73
      %p77 = scmp.eq.s32.totalorder %s16, 0
      %p78 = por %p76, %p77
      %p79 = scmp.ne.s32.totalorder %s71, %s73
      %p80 = scmp.eq.s32.totalorder %s21, 1
      %p81 = por %p79, %p80
      %p82 = scmp.ne.s32.totalorder %s73, %s74
      %p83 = scmp.eq.s32.totalorder %s21, 0
      %p84 = por %p82, %p83
      %p85 = scmp.ne.s32.totalorder %s73, %s74
      %p86 = scmp.eq.s32.totalorder %s22, 1
      %p87 = por %p85, %p86
      %p89 = scmp.ne.s32.totalorder %s74, %s88
      %p90 = scmp.eq.s32.totalorder %s22, 0
      %p91 = por %p89, %p90
      %s92 = ssub.s32 %s16, %s23
      %p93 = scmp.eq.s32.totalorder %s92, 0
      %s95 = sadd.s32 %s94, 1
      %s96 = scalar_select %p93, %s94, %s95
      %p99 = pneg %p93
      %p100 = scmp.eq.s32.totalorder %s16, 1
      %p101 = por %p99, %p100
      %p102 = scmp.ne.s32.totalorder %s94, %s97
      %p103 = scmp.eq.s32.totalorder %s16, 0
      %p104 = por %p102, %p103
      %p105 = scmp.ne.s32.totalorder %s94, %s97
      %p106 = scmp.eq.s32.totalorder %s21, 1
      %p107 = por %p105, %p106
      %p108 = scmp.ne.s32.totalorder %s97, %s98
      %p109 = scmp.eq.s32.totalorder %s21, 0
      %p110 = por %p108, %p109
      %p111 = scmp.ne.s32.totalorder %s97, %s98
      %p112 = scmp.eq.s32.totalorder %s22, 1
      %p113 = por %p111, %p112
      %p115 = scmp.ne.s32.totalorder %s98, %s114
      %p116 = scmp.eq.s32.totalorder %s22, 0
      %p117 = por %p115, %p116
      %p118 = scmp.le.s32.totalorder 1, %s16
      %p119 = scmp.lt.s32.totalorder %s16, 3
      %p120 = pnand %p118, %p119
      %p121 = pneg %p120
      // Predicated region
      $region9: #{tpu_custom_call.1} parent=5 // pred_check
        _
      $region10: #{tpu_custom_call.1} parent=5 // pred_check_branch
        %123 = sbr.rel (%p120) target = $region12
      $region11: #{tpu_custom_call.1} parent=5 // pred_region
        %s124 = ssub.s32 %s16, 1
        // Predicated region
        $region13: #{tpu_custom_call.1} parent=11 // pred_check
          %p125 = pneg %p63
        $region14: #{tpu_custom_call.1} parent=11 // pred_check_branch
          %127 = sbr.rel (%p125) target = $region16
        $region15: #{tpu_custom_call.1} parent=11 // pred_region
          %s129 = ssub.s32 256, 256
          %130 = vsyncadd [#allocation6], %s129
          %s131 = sshll.u32 [#allocation5], 4
          %s132 = int_to_ptr.vmem [resolvable:$true] %s131
          %137 = dma.hbm_to_vmem [thread:$0]  %s1, 256, %s132, [#allocation6], 64, 64, 4
        $region16: #{tpu_custom_call.1} parent=11 // pred_fallthru
          _
        // Predicated region
        $region17: #{tpu_custom_call.1} parent=11 // pred_check
          %p138 = pneg %p84
        $region18: #{tpu_custom_call.1} parent=11 // pred_check_branch
          %140 = sbr.rel (%p138) target = $region20
        $region19: #{tpu_custom_call.1} parent=11 // pred_region
          _
        $region20: #{tpu_custom_call.1} parent=11 // pred_fallthru
          _
      $region12: #{tpu_custom_call.1} parent=5 // pred_fallthru
        _
      %p141 = scmp.lt.s32.totalorder %s16, 2
      // Predicated region
      $region21: #{tpu_custom_call.1} parent=5 // pred_check
        %p142 = pneg %p141
      $region22: #{tpu_custom_call.1} parent=5 // pred_check_branch
        %144 = sbr.rel (%p142) target = $region24
      $region23: #{tpu_custom_call.1} parent=5 // pred_region
        // Predicated region
        $region25: #{tpu_custom_call.1} parent=23 // pred_check
          %p145 = pneg %p36
        $region26: #{tpu_custom_call.1} parent=23 // pred_check_branch
          %147 = sbr.rel (%p145) target = $region28
        $region27: #{tpu_custom_call.1} parent=23 // pred_region
          %s148 = sand.u32 %s26, 1
          %s149 = scalar_lea.sflag [#allocation3], %s148
          %s150 = sand.u32 %s26, 1
          %s151 = smul.addr %s150, 8
          %s152 = scalar_lea.vmem [#allocation2], %s151
          %s153 = smul.u32 2, %s16
          %s155 = ssub.s32 128, 128
          %156 = vsyncadd %s149, %s155
          %s157 = smul.addr %s153, 64
          %s158 = scalar_lea.hbm %s0, %s157
          %s159 = sshll.u32 %s152, 4
          %s160 = int_to_ptr.vmem [resolvable:$true] %s159
          %165 = dma.hbm_to_vmem [thread:$0]  %s158, 128, %s160, %s149, 64, 64, 4
        $region28: #{tpu_custom_call.1} parent=23 // pred_fallthru
          _
      $region24: #{tpu_custom_call.1} parent=5 // pred_fallthru
        _
      %p166 = scmp.le.s32.totalorder 1, %s16
      %p167 = scmp.lt.s32.totalorder %s16, 3
      %p168 = pnand %p166, %p167
      %p169 = pneg %p168
      // Predicated region
      $region29: #{tpu_custom_call.1} parent=5 // pred_check
        _
      $region30: #{tpu_custom_call.1} parent=5 // pred_check_branch
        %171 = sbr.rel (%p168) target = $region32
      $region31: #{tpu_custom_call.1} parent=5 // pred_region
        %s172 = ssub.s32 %s16, 1
        %s173 = sand.u32 %s29, 1
        %s174 = scalar_lea.sflag [#allocation3], %s173
        %s175 = sand.u32 %s29, 1
        %s176 = smul.addr %s175, 8
        %s177 = scalar_lea.vmem [#allocation2], %s176
        // Predicated region
        $region33: #{tpu_custom_call.1} parent=31 // pred_check
          %p178 = pneg %p42
        $region34: #{tpu_custom_call.1} parent=31 // pred_check_branch
          %180 = sbr.rel (%p178) target = $region36
        $region35: #{tpu_custom_call.1} parent=31 // pred_region
          %181 = dma.done %s174, 128
        $region36: #{tpu_custom_call.1} parent=31 // pred_fallthru
          _
        // Predicated region
        $region37: #{tpu_custom_call.1} parent=31 // pred_check
          %p182 = pneg %p63
        $region38: #{tpu_custom_call.1} parent=31 // pred_check_branch
          %184 = sbr.rel (%p182) target = $region40
        $region39: #{tpu_custom_call.1} parent=31 // pred_region
          %185 = dma.done [#allocation6], 256
        $region40: #{tpu_custom_call.1} parent=31 // pred_fallthru
          _
        %s186 = sand.u32 %s29, 1
        %s187 = scalar_lea.sflag [#allocation3], %s186
        %s188 = sand.u32 %s29, 1
        %s189 = smul.addr %s188, 8
        %s190 = scalar_lea.vmem [#allocation2], %s189
        %p191 = pneg %p42
        %p192 = pneg %p39
        %p193 = pneg %p63
        %p194 = pneg %p60
        %p195 = pneg %p84
        %p196 = pneg %p81
        %p197 = pneg %p110
        %p198 = pneg %p107
        %s199 = sand.u32 %s97, 1
        %s200 = scalar_lea.sflag [#allocation4], %s199
        %s201 = sand.u32 %s97, 1
        %s202 = smul.addr %s201, 16
        %s203 = scalar_lea.vmem [#allocation7], %s202
        %s204 = smul.u32 2, %s21
        %s205 = smul.u32 2, %s21
        %v207 = vld [vmem:[%s177] sm:$0xf]
        %v208 = vld [vmem:[%s177 + $0x4] sm:$0xf]
        %v209 = vld [vmem:[#allocation5] sm:$0xf]
        %v210 = vld [vmem:[#allocation5 + $0x4] sm:$0xf]
        %v211 = vld [vmem:[#allocation5 + $0x8] sm:$0xf]
        %v212 = vld [vmem:[#allocation5 + $0xc] sm:$0xf]
        %v213 = vld [vmem:[%s2] sm:$0x1]
        %v215 = vlaneseq
        %v216 = vshrl.u32 %v215, 7
        %v217 = vsub.s32 0, %v216
        %v218 = vrot.slane %v213, %v217
        %v222 = vunpack.c.l.b16 %v207
        %v223 = vunpack.c.l.b16 %v208
        %v224 = vpack.c.b16 %v223, %v222
        %v229 = vunpack.c.l.b16 %v209
        %v230 = vunpack.c.l.b16 %v210
        %v231 = vunpack.c.l.b16 %v211
        %v232 = vunpack.c.l.b16 %v212
        %v233 = vpack.c.b16 %v230, %v229
        %v234 = vpack.c.b16 %v232, %v231
        %vm237 = vcmask 261120
        %v239 = vsel %vm237, %v224, 0
        %241 = vmatprep.subr.bf16.mxu0 0
        %242 = vmatpush1.bf16.msra.mxu0 0
        %243 = vmatprep.subr.bf16.mxu0 0
        %244 = vmatpush1.bf16.msra.mxu0 0
        %245 = vmatprep.subr.bf16.mxu0 0
        %246 = vmatpush1.bf16.msra.mxu0 0
        %247 = vmatprep.subr.bf16.mxu0 0
        %248 = vmatpush1.bf16.msra.mxu0 0
        %249 = vmatprep.subr.bf16.mxu0 0
        %250 = vmatpush1.bf16.msra.mxu0 0
        %251 = vmatprep.subr.bf16.mxu0 0
        %252 = vmatpush1.bf16.msra.mxu0 0
        %253 = vmatprep.subr.bf16.mxu0 0
        %254 = vmatpush1.bf16.msra.mxu0 %v234
        %255 = vmatprep.subr.bf16.mxu0 0
        %256 = vmatpush1.bf16.msra.mxu0 %v233
        %257 = vmatprep.subr.bf16.mxu0 0
        %258 = vmatpush2.bf16.msra.mxu0 0
        %259 = vmatprep.subr.bf16.mxu0 0
        %260 = vmatpush2.bf16.msra.mxu0 0
        %261 = vmatprep.subr.bf16.mxu0 0
        %262 = vmatpush2.bf16.msra.mxu0 0
        %263 = vmatprep.subr.bf16.mxu0 0
        %264 = vmatpush2.bf16.msra.mxu0 0
        %265 = vmatprep.subr.bf16.mxu0 0
        %266 = vmatpush2.bf16.msra.mxu0 0
        %267 = vmatprep.subr.bf16.mxu0 0
        %268 = vmatpush2.bf16.msra.mxu0 0
        %269 = vmatprep.subr.bf16.mxu0 0
        %270 = vmatpush2.bf16.msra.mxu0 0
        %271 = vmatprep.subr.bf16.mxu0 0
        %272 = vmatpush2.bf16.msra.mxu0 0
        %273 = vmatprep.mubr.bf16.mxu0 0
        %274 = vmatmul.mubr.bf16.gmra.mxu0 %v239
        %v275 = vpop.f32.mrf.mxu0
        %v276 = vadd.f32 %v218, %v275
        %v277 = vpop.f32.mrf.mxu0
        %v278 = vpop.f32.mrf.mxu0
        %v279 = vadd.f32 %v218, %v278
        %v280 = vpop.f32.mrf.mxu0
        %281 = vdwg.mxu0
        %282 = vmax.xlane.f32.xlu0 %v276
        %v283 = vpop.xlane.xlu0 %282
        %284 = vmax.xlane.f32.xlu0 %v279
        %v285 = vpop.xlane.xlu0 %284
        %v286 = vsub.f32 %v276, %v283
        %v287 = vsub.f32 %v279, %v285
        %v288 = vmul.f32 %v286, 1.442695
        %v289 = vpow.pop %v288
        %v290 = vmul.f32 %v287, 1.442695
        %v291 = vpow.pop %v290
        %292 = vadd.xlane.f32.xlu0 %v289
        %v293 = vpop.xlane.xlu0 %292
        %294 = vadd.xlane.f32.xlu0 %v291
        %v295 = vpop.xlane.xlu0 %294
        %v296 = vlog2.pop %v293
        %v297 = vmul.f32 %v296, 0.6931472
        %v298 = vlog2.pop %v295
        %v299 = vmul.f32 %v298, 0.6931472
        %v300 = vsub.f32 %v286, %v297
        %v301 = vsub.f32 %v287, %v299
        %vm302 = vcmask 236544
        %303 = vst.msk [vmem:[%s203] sm:$0xff] %vm302, %v300
        %304 = vst.msk [vmem:[%s203 + $0x8] sm:$0xff] %vm302, %v301
        %s305 = sand.u32 %s97, 1
        %s306 = scalar_lea.sflag [#allocation4], %s305
        %s307 = sand.u32 %s97, 1
        %s308 = smul.addr %s307, 16
        %s309 = scalar_lea.vmem [#allocation7], %s308
        // Predicated region
        $region41: #{tpu_custom_call.1} parent=31 // pred_check
          %p310 = pneg %p107
        $region42: #{tpu_custom_call.1} parent=31 // pred_check_branch
          %312 = sbr.rel (%p310) target = $region44
        $region43: #{tpu_custom_call.1} parent=31 // pred_region
          %s313 = smul.u32 2, %s21
          %s315 = ssub.s32 256, 256
          %316 = vsyncadd %s306, %s315
          %s317 = smul.addr %s313, 128
          %s318 = scalar_lea.hbm %s3, %s317
          %s319 = sshll.u32 %s309, 4
          %s320 = int_to_ptr.vmem [resolvable:$true] %s319
          %325 = dma.vmem_to_hbm [thread:$0]  %s320, 256, %s318, %s306, 128, 128, 8
        $region44: #{tpu_custom_call.1} parent=31 // pred_fallthru
          _
      $region32: #{tpu_custom_call.1} parent=5 // pred_fallthru
        _
      %p326 = scmp.le.s32.totalorder 2, %s16
      // Predicated region
      $region45: #{tpu_custom_call.1} parent=5 // pred_check
        %p327 = pneg %p326
      $region46: #{tpu_custom_call.1} parent=5 // pred_check_branch
        %329 = sbr.rel (%p327) target = $region48
      $region47: #{tpu_custom_call.1} parent=5 // pred_region
        %s330 = ssub.s32 %s16, 2
        // Predicated region
        $region49: #{tpu_custom_call.1} parent=47 // pred_check
          %p331 = pneg %p113
        $region50: #{tpu_custom_call.1} parent=47 // pred_check_branch
          %333 = sbr.rel (%p331) target = $region52
        $region51: #{tpu_custom_call.1} parent=47 // pred_region
          %s334 = sand.u32 %s98, 1
          %s335 = scalar_lea.sflag [#allocation4], %s334
          %s336 = sand.u32 %s98, 1
          %s337 = smul.addr %s336, 16
          %s338 = scalar_lea.vmem [#allocation7], %s337
          %339 = dma.done %s335, 256
        $region52: #{tpu_custom_call.1} parent=47 // pred_fallthru
          _
      $region48: #{tpu_custom_call.1} parent=5 // pred_fallthru
        _
    $region6: #{tpu_custom_call.1} parent=1 // loop_footer
      %s20 = sadd.s32 1, %s16
    $region7: #{tpu_custom_call.1} parent=1 // loop_footer_branch
      %15 = sbr.rel target = $region3
    $region8: #{tpu_custom_call.1} parent=1 // loop_exit
      _
    %340 = vsyncpa [#allocation3], 1
    %s341 = scalar_lea.sflag [#allocation3], 1
    %342 = vsyncpa %s341, 1
    %343 = vsyncpa [#allocation6], 1
    %344 = vsyncpa [#allocation4], 1
    %s345 = scalar_lea.sflag [#allocation4], 1
    %346 = vsyncpa %s345, 1

</llo_original>
